<compile_context>
chip_gen: v7x
topology: tpu7x:2x2x1
jax: 0.10.0
libtpu: 0.0.40
codegen_flags: <defaults>
</compile_context>

<pallas_src>
import jax
import jax.numpy as jnp
from jax.experimental import pallas as pl
from jax.experimental.pallas import tpu as pltpu

_LANES = 128


def _device_kind():
    try:
        return jax.devices()[0].device_kind.lower()
    except Exception:  # pragma: no cover - defensive
        return ""


def _auto_block_bytes_and_cores():
    """Per-generation (bytes per input block, TensorCores per chip)."""
    kind = _device_kind()
    if "v7" in kind:
        # v7x: 3.2 TB/s HBM, 2 TCs, 32 MiB default scoped VMEM (64 MiB phys).
        # 4 MiB/block -> 16 MiB double-buffered, no vmem_limit bump needed.
        return 4 * 1024 * 1024, 2
    if "v6" in kind:
        # v6e: 32 MiB default scoped VMEM, 1 TC.
        return 4 * 1024 * 1024, 1
    # v5e / unknown: 16 MiB default scoped VMEM -> keep live inputs at 8 MiB.
    return 2 * 1024 * 1024, 1


def _make_mae_kernel(*, tile_rows, lanes, rows_valid, n_blocks, steps_per_core,
                     has_partial_last, has_invalid, fold_sublanes):
    """Build a sum(|x - y|) reduction kernel specialized to static params."""
    n_full = n_blocks - 1 if has_partial_last else n_blocks

    def _fold(ad):
        if fold_sublanes:
            # VPU-only partial sum: fold the leading axis while keeping the
            # (8, lanes) sublane x lane structure -> no per-step XLU work.
            return ad.reshape(-1, 8, lanes).sum(axis=0)
        # Tiny-input path (single block with fewer than 8 rows).
        return jnp.sum(ad, axis=0, keepdims=True)

    def kernel(x_ref, y_ref, o_ref, acc_ref):
        c = pl.program_id(0)          # TensorCore ("parallel") axis
        i = pl.program_id(1)          # streaming ("arbitrary") axis
        n_i = pl.num_programs(1)

        @pl.when(i == 0)
        def _():
            acc_ref[...] = jnp.zeros_like(acc_ref)

        gb = c * steps_per_core + i   # global block index

        def _abs_diff():
            x = x_ref[...].astype(jnp.float32)
            y = y_ref[...].astype(jnp.float32)
            return jnp.abs(x - y)

        # Steady state: full in-range block, no masking in the hot loop.
        if n_full > 0:
            if has_partial_last or has_invalid:
                @pl.when(gb < n_full)
                def _():
                    acc_ref[...] += _fold(_abs_diff())
            else:
                acc_ref[...] += _fold(_abs_diff())

        # Last, partially out-of-range block: mask rows past rows_valid.
        if has_partial_last:
            @pl.when(gb == n_blocks - 1)
            def _():
                ad = _abs_diff()
                row_ids = gb * tile_rows + jax.lax.broadcasted_iota(
                    jnp.int32, (tile_rows, 1), 0)
                ad = jnp.where(row_ids < rows_valid, ad, 0.0)
                acc_ref[...] += _fold(ad)

        # A fully out-of-range pad block (odd block count split across cores)
        # falls through both guards above and accumulates nothing.

        @pl.when(i == n_i - 1)
        def _():
            # Single cross-lane/cross-sublane reduce per core.
            o_ref[...] = jnp.sum(acc_ref[...]).reshape(1, 1, 1)

    return kernel


def centroid_loss(inp, target, *, tile_rows=None, num_cores=None, lanes=_LANES):
    """Pallas implementation of torch.mean(torch.abs(input - target))."""
    assert inp.shape == target.shape, "input/target must have the same shape"
    total = inp.size
    assert total > 0

    auto_bytes, auto_cores = _auto_block_bytes_and_cores()
    itemsize = jnp.dtype(inp.dtype).itemsize
    if tile_rows is None:
        # dtype-aware: fixed bytes per block -> bf16 gets 2x the rows of f32.
        tile_rows = max(8, (auto_bytes // (lanes * itemsize)) // 8 * 8)
    if num_cores is None:
        num_cores = auto_cores

    flat_x = inp.reshape(-1)       # free reshape of a contiguous array
    flat_y = target.reshape(-1)

    if total % lanes == 0:
        rows = total // lanes      # lane-dense 2D reshape below is free
    else:
        # Rare fallback: pad only up to the next lane multiple; padded zeros
        # contribute |0 - 0| = 0 to the sum.
        rows = pl.cdiv(total, lanes)
        pad = rows * lanes - total
        flat_x = jnp.pad(flat_x, (0, pad))
        flat_y = jnp.pad(flat_y, (0, pad))

    x2d = flat_x.reshape(rows, lanes)
    y2d = flat_y.reshape(rows, lanes)

    # Effective block: the full array if small, else `tile_rows` rows.
    tile_rows_eff = rows if rows <= tile_rows else tile_rows

    n_blocks = pl.cdiv(rows, tile_rows_eff)
    num_cores = max(1, min(int(num_cores), n_blocks))
    steps_per_core = pl.cdiv(n_blocks, num_cores)

    has_partial_last = (rows % tile_rows_eff) != 0
    has_invalid = num_cores * steps_per_core > n_blocks
    fold_sublanes = (tile_rows_eff % 8) == 0
    acc_rows = 8 if fold_sublanes else 1

    kernel = _make_mae_kernel(
        tile_rows=tile_rows_eff, lanes=lanes, rows_valid=rows,
        n_blocks=n_blocks, steps_per_core=steps_per_core,
        has_partial_last=has_partial_last, has_invalid=has_invalid,
        fold_sublanes=fold_sublanes)

    if has_invalid:
        # Clamp the pad step of the last core to a valid block; its data is
        # never accumulated (skipped in-kernel).
        def in_map(c, i):
            return (jnp.minimum(c * steps_per_core + i, n_blocks - 1), 0)
    else:
        def in_map(c, i):
            return (c * steps_per_core + i, 0)

    in_spec = pl.BlockSpec((tile_rows_eff, lanes), in_map)

    cost = pl.CostEstimate(
        flops=2 * total,
        transcendentals=0,
        bytes_accessed=2 * total * int(itemsize) + 4 * num_cores)

    partials = pl.pallas_call(
        kernel,
        out_shape=jax.ShapeDtypeStruct((num_cores, 1, 1), jnp.float32),
        grid_spec=pltpu.PrefetchScalarGridSpec(
            num_scalar_prefetch=0,
            grid=(num_cores, steps_per_core),
            in_specs=[in_spec, in_spec],
            out_specs=pl.BlockSpec((1, 1, 1), lambda c, i: (c, 0, 0)),
            scratch_shapes=[pltpu.VMEM((acc_rows, lanes), jnp.float32)],
        ),
        compiler_params=pltpu.CompilerParams(
            dimension_semantics=("parallel", "arbitrary"),
        ),
        cost_estimate=cost,
    )(x2d, y2d)

    # Mean over the ORIGINAL element count (padding excluded).
    inv_n = jnp.float32(1.0 / float(total))
    return (jnp.sum(partials) * inv_n).astype(jnp.float32)


if __name__ == "__main__":
    key = jax.random.PRNGKey(0)
    k1, k2 = jax.random.split(key)

    # Primary small-shape check (NCHW segmentation-style inputs).
    x = jax.random.normal(k1, (2, 4, 16, 16), dtype=jnp.float32)
    t = jax.random.normal(k2, (2, 4, 16, 16), dtype=jnp.float32)
    out = jax.block_until_ready(centroid_loss(x, t))
    ref = jnp.mean(jnp.abs(x - t))
    assert jnp.allclose(out, ref, rtol=1e-5, atol=1e-5), (out, ref)

    # Multi-step grid + partial-last-block masking + forced 2-core split
    # (serial on 1-TC chips, parallel on v7x): exercises the clamped
    # index_map, the skipped pad block and per-core partial outputs.
    x2 = jax.random.normal(k1, (2, 4, 16, 20), dtype=jnp.float32)
    t2 = jax.random.normal(k2, (2, 4, 16, 20), dtype=jnp.float32)
    out2 = jax.block_until_ready(
        centroid_loss(x2, t2, tile_rows=8, num_cores=2))
    ref2 = jnp.mean(jnp.abs(x2 - t2))
    assert jnp.allclose(out2, ref2, rtol=1e-5, atol=1e-5), (out2, ref2)

    # Non-lane-divisible fallback (tiny tail pad) + bf16 upcast path.
    x3 = jax.random.normal(k1, (2, 3, 5, 7), dtype=jnp.bfloat16)
    t3 = jax.random.normal(k2, (2, 3, 5, 7), dtype=jnp.bfloat16)
    out3 = jax.block_until_ready(centroid_loss(x3, t3))
    ref3 = jnp.mean(jnp.abs(x3.astype(jnp.float32) - t3.astype(jnp.float32)))
    assert jnp.allclose(out3, ref3, rtol=1e-5, atol=1e-5), (out3, ref3)

    print("KERNEL_OK")
</pallas_src>

<mosaic_0001>
module attributes {stable_mosaic.version = 11 : i64} {
  func.func @kernel(%arg0: i32, %arg1: i32, %arg2: memref<16x128xf32, #tpu.memory_space<vmem>>, %arg3: memref<16x128xf32, #tpu.memory_space<vmem>>, %arg4: memref<1x1x1xf32, #tpu.memory_space<vmem>>, %arg5: memref<8x128xf32, #tpu.memory_space<vmem>>) attributes {dimension_semantics = [#tpu.dimension_semantics<parallel>, #tpu.dimension_semantics<arbitrary>], iteration_bounds = array<i64: 1, 1>, scalar_prefetch = 0 : i64, scratch_operands = 1 : i64, tpu.core_type = #tpu.core_type<tc>, window_params = [{transform_indices = @transform_0, window_bounds = array<i64: 16, 128>}, {transform_indices = @transform_1, window_bounds = array<i64: 16, 128>}, {transform_indices = @transform_2, window_bounds = array<i64: 1, 1, 1>}]} {
    %c0_i32 = arith.constant 0 : i32
    %0 = arith.cmpi eq, %arg1, %c0_i32 : i32
    %1 = arith.extui %0 : i1 to i32
    %c0_i32_0 = arith.constant 0 : i32
    %2 = arith.cmpi ne, %1, %c0_i32_0 : i32
    scf.if %2 {
      %cst_10 = arith.constant 0.000000e+00 : f32
      %15 = vector.broadcast %cst_10 : f32 to vector<8x128xf32>
      %c0_11 = arith.constant 0 : index
      %c0_12 = arith.constant 0 : index
      %16 = vector.load %arg5[%c0_11, %c0_12] : memref<8x128xf32, #tpu.memory_space<vmem>>, vector<8x128xf32>
      tpu.vector_store %arg5[%c0_11, %c0_12], %15 {strides = array<i32>} : memref<8x128xf32, #tpu.memory_space<vmem>>, vector<8x128xf32>,
    } else {
    }
    %c0 = arith.constant 0 : index
    %c0_1 = arith.constant 0 : index
    %3 = vector.load %arg5[%c0, %c0_1] : memref<8x128xf32, #tpu.memory_space<vmem>>, vector<8x128xf32>
    %c0_2 = arith.constant 0 : index
    %c0_3 = arith.constant 0 : index
    %4 = vector.load %arg2[%c0_2, %c0_3] : memref<16x128xf32, #tpu.memory_space<vmem>>, vector<16x128xf32>
    %c0_4 = arith.constant 0 : index
    %c0_5 = arith.constant 0 : index
    %5 = vector.load %arg3[%c0_4, %c0_5] : memref<16x128xf32, #tpu.memory_space<vmem>>, vector<16x128xf32>
    %6 = arith.subf %4, %5 : vector<16x128xf32>
    %7 = math.absf %6 : vector<16x128xf32>
    %8 = vector.shape_cast %7 : vector<16x128xf32> to vector<2x8x128xf32>
    %cst = arith.constant dense<0.000000e+00> : vector<8x128xf32>
    %9 = vector.multi_reduction <add>, %8, %cst [0] : vector<2x8x128xf32> to vector<8x128xf32>
    %10 = arith.addf %3, %9 : vector<8x128xf32>
    %c0_6 = arith.constant 0 : index
    %c0_7 = arith.constant 0 : index
    %11 = vector.load %arg5[%c0_6, %c0_7] : memref<8x128xf32, #tpu.memory_space<vmem>>, vector<8x128xf32>
    tpu.vector_store %arg5[%c0_6, %c0_7], %10 {strides = array<i32>} : memref<8x128xf32, #tpu.memory_space<vmem>>, vector<8x128xf32>,
    %c0_i32_8 = arith.constant 0 : i32
    %12 = arith.cmpi eq, %arg1, %c0_i32_8 : i32
    %13 = arith.extui %12 : i1 to i32
    %c0_i32_9 = arith.constant 0 : i32
    %14 = arith.cmpi ne, %13, %c0_i32_9 : i32
    scf.if %14 {
      %c0_10 = arith.constant 0 : index
      %c0_11 = arith.constant 0 : index
      %15 = vector.load %arg5[%c0_10, %c0_11] : memref<8x128xf32, #tpu.memory_space<vmem>>, vector<8x128xf32>
      %16 = vector.shape_cast %15 : vector<8x128xf32> to vector<1x8x128xf32>
      %cst_12 = arith.constant dense<0.000000e+00> : vector<1xf32>
      %17 = vector.multi_reduction <add>, %16, %cst_12 [1, 2] : vector<1x8x128xf32> to vector<1xf32>
      %18 = vector.shape_cast %17 : vector<1xf32> to vector<1x1x1xf32>
      %19 = vector.extract %18[0, 0, 0] : f32 from vector<1x1x1xf32>
      %20 = vector.broadcast %19 : f32 to vector<1x1x1xf32>
      %c0_13 = arith.constant 0 : index
      %c0_14 = arith.constant 0 : index
      %c0_15 = arith.constant 0 : index
      %21 = vector.load %arg4[%c0_13, %c0_14, %c0_15] : memref<1x1x1xf32, #tpu.memory_space<vmem>>, vector<1x1x1xf32>
      tpu.vector_store %arg4[%c0_13, %c0_14, %c0_15], %20 {strides = array<i32>} : memref<1x1x1xf32, #tpu.memory_space<vmem>>, vector<1x1x1xf32>,
    } else {
    }
    return
  }
  func.func @transform_0(%arg0: i32, %arg1: i32) -> (i32, i32) {
    %c1_i32 = arith.constant 1 : i32
    %0 = arith.muli %arg0, %c1_i32 : i32
    %1 = arith.addi %0, %arg1 : i32
    %c0_i32 = arith.constant 0 : i32
    %c0_i32_0 = arith.constant 0 : i32
    return %1, %c0_i32 : i32, i32
  }
  func.func @transform_1(%arg0: i32, %arg1: i32) -> (i32, i32) {
    %c1_i32 = arith.constant 1 : i32
    %0 = arith.muli %arg0, %c1_i32 : i32
    %1 = arith.addi %0, %arg1 : i32
    %c0_i32 = arith.constant 0 : i32
    %c0_i32_0 = arith.constant 0 : i32
    return %1, %c0_i32 : i32, i32
  }
  func.func @transform_2(%arg0: i32, %arg1: i32) -> (i32, i32, i32) {
    %c0_i32 = arith.constant 0 : i32
    %c0_i32_0 = arith.constant 0 : i32
    %c0_i32_1 = arith.constant 0 : i32
    return %arg0, %c0_i32, %c0_i32_0 : i32, i32, i32
  }
}

</mosaic_0001>

<llo_original>
// kernel: tpu_custom_call.1
$region0: #{tpu_custom_call.1}
  #allocation0 [shape = 'u32[]', space=smem, size = 0x4, offset = 0x4, fixed_abs, tag = 'smem constant byte address 0x4 - core index']
  #allocation1 [shape = 'u32[144,128]{1,0:T(1,128)}', space=vmem, size = 0x12000, scoped, tag = 'internal scratch']
  #allocation2 [shape = 'f32[8,128]{1,0:T(8,128)}', space=vmem, size = 0x1000, scoped, tag = 'scratch operand']
  %s0 = inlined_call_operand.hbm [shape: f32[16,128], index: 0, kind: input, shape index: {}]
  %s1 = inlined_call_operand.hbm [shape: f32[16,128], index: 1, kind: input, shape index: {}]
  %s2 = inlined_call_operand.hbm [shape: f32[1,1,1], index: 2, kind: output, shape index: {}]
  %s3 = sld [smem:[#allocation0]]
  $region34: #{tpu_custom_call.1} parent=0
    _
  %s5 = ssub.s32 1, %s3
  %s6 = scalar_select 0, %s5, %s3
  $region1: #{tpu_custom_call.1} parent=0
    #allocation3 [shape = 'u8[8192]{0}', space=vmem, size = 0x2000, scoped, tag = 'input window, operand 0, single buffered']
    #allocation4 [shape = 's32[1]{0}', space=sflag, size = 0x4, scoped, tag = 'scoped memory for tpu_custom_call.1']
    #allocation5 [shape = 's32[1]{0}', space=sflag, size = 0x4, scoped, tag = 'scoped memory for tpu_custom_call.1']
    #allocation6 [shape = 'u8[8192]{0}', space=vmem, size = 0x2000, scoped, tag = 'input window, operand 1, single buffered']
    #allocation7 [shape = 's32[1]{0}', space=sflag, size = 0x4, scoped, tag = 'scoped memory for tpu_custom_call.1']
    #allocation8 [shape = 'u8[512]{0}', space=vmem, size = 0x400, scoped, tag = 'output window, operand 0, single buffered']
    %7 = vsyncpa [#allocation4], 0
    %8 = vsyncpa [#allocation7], 0
    %9 = vsyncpa [#allocation5], 0
    // Predicated region
    $region2: #{tpu_custom_call.1} parent=1 // pred_check
      _
    $region3: #{tpu_custom_call.1} parent=1 // pred_check_branch
      %11 = sbr.rel (0) target = $region5
    $region4: #{tpu_custom_call.1} parent=1 // pred_region
      %s12 = sadd.s32 0, 0
      %s13 = smul.u32 2, %s12
      %s15 = ssub.s32 256, 256
      %16 = vsyncadd [#allocation4], %s15
      %s17 = smul.addr %s13, 128
      %s18 = scalar_lea.hbm %s0, %s17
      %s19 = sshll.u32 [#allocation3], 4
      %s20 = int_to_ptr.vmem [resolvable:$true] %s19
      %25 = dma.hbm_to_vmem [thread:$0]  %s18, 256, %s20, [#allocation4], 128, 128, 8
    $region5: #{tpu_custom_call.1} parent=1 // pred_fallthru
      _
    // Predicated region
    $region6: #{tpu_custom_call.1} parent=1 // pred_check
      _
    $region7: #{tpu_custom_call.1} parent=1 // pred_check_branch
      %27 = sbr.rel (0) target = $region9
    $region8: #{tpu_custom_call.1} parent=1 // pred_region
      %s28 = sadd.s32 0, 0
      %s29 = smul.u32 2, %s28
      %s31 = ssub.s32 256, 256
      %32 = vsyncadd [#allocation7], %s31
      %s33 = smul.addr %s29, 128
      %s34 = scalar_lea.hbm %s1, %s33
      %s35 = sshll.u32 [#allocation6], 4
      %s36 = int_to_ptr.vmem [resolvable:$true] %s35
      %41 = dma.hbm_to_vmem [thread:$0]  %s34, 256, %s36, [#allocation7], 128, 128, 8
    $region9: #{tpu_custom_call.1} parent=1 // pred_fallthru
      _
    // Predicated region
    $region10: #{tpu_custom_call.1} parent=1 // pred_check
      _
    $region11: #{tpu_custom_call.1} parent=1 // pred_check_branch
      %43 = sbr.rel (0) target = $region13
    $region12: #{tpu_custom_call.1} parent=1 // pred_region
      %44 = dma.done [#allocation4], 256
    $region13: #{tpu_custom_call.1} parent=1 // pred_fallthru
      _
    // Predicated region
    $region14: #{tpu_custom_call.1} parent=1 // pred_check
      _
    $region15: #{tpu_custom_call.1} parent=1 // pred_check_branch
      %46 = sbr.rel (0) target = $region17
    $region16: #{tpu_custom_call.1} parent=1 // pred_region
      %47 = dma.done [#allocation7], 256
    $region17: #{tpu_custom_call.1} parent=1 // pred_fallthru
      _
    %s48 = sadd.s32 0, 0
    %s49 = smul.u32 2, %s48
    %s50 = sadd.s32 0, 0
    %s51 = smul.u32 2, %s50
    %p52 = scmp.eq.s32.totalorder 0, 0
    // Predicated region
    $region18: #{tpu_custom_call.1} parent=1 // pred_check
      %p53 = pneg %p52
    $region19: #{tpu_custom_call.1} parent=1 // pred_check_branch
      %55 = sbr.rel (%p53) target = $region21
    $region20: #{tpu_custom_call.1} parent=1 // pred_region
      %56 = vst [vmem:[#allocation2] sm:$0xff] 0.0
    $region21: #{tpu_custom_call.1} parent=1 // pred_fallthru
      _
    %v57 = vld [vmem:[#allocation2] sm:$0xff]
    %v58 = vld [vmem:[#allocation3] sm:$0xff]
    %v59 = vld [vmem:[#allocation3 + $0x8] sm:$0xff]
    %v60 = vld [vmem:[#allocation6] sm:$0xff]
    %v61 = vld [vmem:[#allocation6 + $0x8] sm:$0xff]
    %v62 = vsub.f32 %v58, %v60
    %v63 = vsub.f32 %v59, %v61
    %v64 = vand.u32 2147483647, %v62
    %v65 = vand.u32 2147483647, %v63
    %v66 = vadd.f32 %v64, %v65
    %v67 = vadd.f32 %v57, %v66
    %68 = vst [vmem:[#allocation2] sm:$0xff] %v67
    // Predicated region
    $region22: #{tpu_custom_call.1} parent=1 // pred_check
      %p69 = pneg %p52
    $region23: #{tpu_custom_call.1} parent=1 // pred_check_branch
      %71 = sbr.rel (%p69) target = $region25
    $region24: #{tpu_custom_call.1} parent=1 // pred_region
      %v72 = vld [vmem:[#allocation2] sm:$0xff]
      %73 = vadd.xlane.f32.xlu0 %v72
      %v74 = vpop.xlane.xlu0 %73
      %v75 = vrot.slane %v74, 4
      %v76 = vadd.f32 %v74, %v75
      %v77 = vrot.slane %v76, 2
      %v78 = vadd.f32 %v76, %v77
      %v79 = vrot.slane %v78, 1
      %v80 = vadd.f32 %v78, %v79
      %s81 = vtos %v80
      %v82 = vstv %s81
      %vm83 = vcmask 0
      %84 = vst.msk [vmem:[#allocation8] sm:$0x1] %vm83, %v82
    $region25: #{tpu_custom_call.1} parent=1 // pred_fallthru
      _
    // Predicated region
    $region26: #{tpu_custom_call.1} parent=1 // pred_check
      _
    $region27: #{tpu_custom_call.1} parent=1 // pred_check_branch
      %86 = sbr.rel (0) target = $region29
    $region28: #{tpu_custom_call.1} parent=1 // pred_region
      %s88 = ssub.s32 16, 16
      %89 = vsyncadd [#allocation5], %s88
      %s91 = sshll.u32 [#allocation8], 4
      %s92 = int_to_ptr.vmem [resolvable:$true] %s91
      %94 = dma.vmem_to_hbm [thread:$0]  %s92, 16, %s2, [#allocation5]
    $region29: #{tpu_custom_call.1} parent=1 // pred_fallthru
      _
    // Predicated region
    $region30: #{tpu_custom_call.1} parent=1 // pred_check
      _
    $region31: #{tpu_custom_call.1} parent=1 // pred_check_branch
      %96 = sbr.rel (0) target = $region33
    $region32: #{tpu_custom_call.1} parent=1 // pred_region
      %97 = dma.done [#allocation5], 16
    $region33: #{tpu_custom_call.1} parent=1 // pred_fallthru
      _
    %98 = vsyncpa [#allocation4], 1
    %99 = vsyncpa [#allocation7], 1
    %100 = vsyncpa [#allocation5], 1

</llo_original>
